<compile_context>
chip_gen: v5e
topology: v5e:2x2
jax: 0.10.0
libtpu: 0.0.40
codegen_flags: <defaults>
</compile_context>

<pallas_src>
import math

import jax
import jax.numpy as jnp
from jax.experimental import pallas as pl
from jax.experimental.pallas import tpu as pltpu


_TINY_BYTES = 128 * 1024                 # below this, fused XLA elementwise wins
_TILE_TARGET_BYTES = 4 * 1024 * 1024     # ~4 MiB tiles -> 16 MiB double-buffered footprint
_LANE_CHOICES = (2048, 1024, 512, 256, 128)


def _scaling_af_kernel(x_ref, o_ref, *, log_scale, compute_dtype):
    # scale_factor ** tanh(x) == exp(tanh(x) * ln(scale_factor))
    x = x_ref[...].astype(compute_dtype)
    y = jnp.exp(jnp.tanh(x) * jnp.asarray(log_scale, compute_dtype))
    o_ref[...] = y.astype(o_ref.dtype)


def _sublane_multiple(itemsize):
    # Sub-32-bit dtypes pack along sublanes: bf16/fp16 -> 16 rows, int8/fp8 -> 32.
    return max(8, 8 * (4 // max(1, itemsize)))


def _compute_dtype(x_dtype):
    """bf16-native transcendentals on v6e/v7x; f32 everywhere else (incl. v5e)."""
    if jnp.dtype(x_dtype) == jnp.dtype(jnp.bfloat16):
        try:
            kind = jax.devices()[0].device_kind.lower()
        except Exception:
            kind = ""
        if ("v6" in kind) or ("v7" in kind):
            return jnp.bfloat16
    return jnp.float32


def _pick_lanes(total):
    """Widest lane-dense width that divides `total`; else pad to a multiple of 128."""
    for lanes in _LANE_CHOICES:
        if total % lanes == 0:
            return lanes, False
    return 128, True


def _pick_block_rows(rows, lanes, itemsize):
    """Sublane-aligned block height targeting ~4 MiB tiles.

    Inputs that fit in one target tile get a single full-array block
    (grid=(1,)); larger inputs get ceil(rows/block_rows) steps, which is >= 4
    once the input reaches ~16 MiB (enough to keep both v7x TensorCores fed
    without over-fragmenting mid-size tensors on single-TC v5e/v6e).
    """
    sub = _sublane_multiple(itemsize)
    target_rows = max(sub, _TILE_TARGET_BYTES // (lanes * itemsize))
    if rows <= target_rows:
        return rows                       # whole array = one (full-dim) block
    block_rows = min(target_rows, rows)
    return max(sub, (block_rows // sub) * sub)


def scaling_af(x, scale_factor, *, force_pallas=False):
    """Applies y = scale_factor ** tanh(x) elementwise via a Pallas TPU kernel."""
    sf = float(scale_factor)
    assert sf > 0.0, "ScalingAF: scale_factor must be > 0"
    log_scale = math.log(sf)

    orig_shape = x.shape
    orig_dtype = x.dtype
    itemsize = jnp.dtype(orig_dtype).itemsize
    total = math.prod(orig_shape) if orig_shape else 1

    # Tiny-input fast path: fixed kernel/reshape overhead dwarfs the HBM time.
    if total * itemsize < _TINY_BYTES and not force_pallas:
        xf = x.astype(jnp.float32)
        return jnp.exp(jnp.tanh(xf) * log_scale).astype(orig_dtype)

    lanes, needs_pad = _pick_lanes(total)

    x_flat = x.reshape(-1)
    if needs_pad:
        # Unavoidable only when total % 128 != 0. Pad just to a multiple of the
        # lane width; the partial last grid block is handled by Pallas masking.
        pad_total = pl.cdiv(total, lanes) * lanes
        x_flat = jnp.pad(x_flat, (0, pad_total - total))
    else:
        pad_total = total
    rows = pad_total // lanes
    x2d = x_flat.reshape(rows, lanes)

    block_rows = _pick_block_rows(rows, lanes, itemsize)
    grid = (pl.cdiv(rows, block_rows),)

    compute_dtype = _compute_dtype(orig_dtype)
    kernel = lambda x_ref, o_ref: _scaling_af_kernel(
        x_ref, o_ref, log_scale=log_scale, compute_dtype=compute_dtype)

    # Alias only when padding produced a fresh buffer that is dead after the
    # call (never clobber the caller's x in the unpadded/view case).
    io_aliases = {0: 0} if needs_pad else {}

    out2d = pl.pallas_call(
        kernel,
        out_shape=jax.ShapeDtypeStruct((rows, lanes), orig_dtype),
        grid_spec=pltpu.PrefetchScalarGridSpec(
            num_scalar_prefetch=0,
            grid=grid,
            in_specs=[pl.BlockSpec((block_rows, lanes), lambda i: (i, 0))],
            out_specs=pl.BlockSpec((block_rows, lanes), lambda i: (i, 0)),
        ),
        compiler_params=pltpu.CompilerParams(
            dimension_semantics=("parallel",),
            vmem_limit_bytes=32 * 1024 * 1024,
        ),
        cost_estimate=pl.CostEstimate(
            flops=pad_total,
            transcendentals=2 * pad_total,
            bytes_accessed=2 * pad_total * itemsize,
        ),
        input_output_aliases=io_aliases,
    )(x2d)

    out_flat = out2d.reshape(-1)
    if needs_pad:
        out_flat = out_flat[:total]
    return out_flat.reshape(orig_shape)


if __name__ == "__main__":
    key = jax.random.PRNGKey(0)
    scale_factor = 2.0  # deterministic module hyperparameter

    # NCHW input, small shapes: batch=2, channels=4, spatial=16x16
    x = jax.random.normal(key, (2, 4, 16, 16), dtype=jnp.float32)
    y_ref = jnp.power(jnp.float32(scale_factor), jnp.tanh(x))

    # Force the Pallas path even though this demo tensor is tiny.
    y = jax.block_until_ready(scaling_af(x, scale_factor, force_pallas=True))
    assert y.shape == x.shape and y.dtype == x.dtype
    assert jnp.allclose(y, y_ref, rtol=1e-5, atol=1e-5), "pallas path mismatch"

    # Default dispatch (tiny-input fast path) must agree too.
    y_fast = jax.block_until_ready(scaling_af(x, scale_factor))
    assert jnp.allclose(y_fast, y_ref, rtol=1e-5, atol=1e-5), "fast path mismatch"

    # Element count not a multiple of 128 exercises the (rare) padded path.
    x_odd = jax.random.normal(jax.random.PRNGKey(0), (2, 4, 7, 7), dtype=jnp.float32)
    y_odd = jax.block_until_ready(scaling_af(x_odd, scale_factor, force_pallas=True))
    y_odd_ref = jnp.power(jnp.float32(scale_factor), jnp.tanh(x_odd))
    assert jnp.allclose(y_odd, y_odd_ref, rtol=1e-5, atol=1e-5), "padded path mismatch"

    print("KERNEL_OK")
</pallas_src>

<mosaic_0001>
module attributes {stable_mosaic.version = 11 : i64} {
  func.func @_lambda_(%arg0: i32, %arg1: memref<1x2048xf32, #tpu.memory_space<vmem>>, %arg2: memref<1x2048xf32, #tpu.memory_space<vmem>>) attributes {dimension_semantics = [#tpu.dimension_semantics<parallel>], iteration_bounds = array<i64: 1>, scalar_prefetch = 0 : i64, scratch_operands = 0 : i64, tpu.core_type = #tpu.core_type<tc>, window_params = [{transform_indices = @transform_0, window_bounds = array<i64: 1, 2048>}, {transform_indices = @transform_1, window_bounds = array<i64: 1, 2048>}]} {
    %c0 = arith.constant 0 : index
    %c0_0 = arith.constant 0 : index
    %0 = vector.load %arg1[%c0, %c0_0] : memref<1x2048xf32, #tpu.memory_space<vmem>>, vector<1x2048xf32>
    %1 = math.tanh %0 : vector<1x2048xf32>
    %cst = arith.constant 0.693147182 : f32
    %2 = vector.broadcast %cst : f32 to vector<1x2048xf32>
    %3 = arith.mulf %1, %2 : vector<1x2048xf32>
    %4 = math.exp %3 : vector<1x2048xf32>
    %c0_1 = arith.constant 0 : index
    %c0_2 = arith.constant 0 : index
    %5 = vector.load %arg2[%c0_1, %c0_2] : memref<1x2048xf32, #tpu.memory_space<vmem>>, vector<1x2048xf32>
    tpu.vector_store %arg2[%c0_1, %c0_2], %4 {strides = array<i32>} : memref<1x2048xf32, #tpu.memory_space<vmem>>, vector<1x2048xf32>,
    return
  }
  func.func @transform_0(%arg0: i32) -> (i32, i32) {
    %c0_i32 = arith.constant 0 : i32
    %c0_i32_0 = arith.constant 0 : i32
    return %arg0, %c0_i32 : i32, i32
  }
  func.func @transform_1(%arg0: i32) -> (i32, i32) {
    %c0_i32 = arith.constant 0 : i32
    %c0_i32_0 = arith.constant 0 : i32
    return %arg0, %c0_i32 : i32, i32
  }
}

</mosaic_0001>

<llo_original>
// kernel: tpu_custom_call.1
$region0: #{tpu_custom_call.1}
  #allocation0 [shape = 'u32[]', space=smem, size = 0x4, offset = 0x4, fixed_abs, tag = 'smem constant byte address 0x4 - core index']
  #allocation1 [shape = 'u32[72,128]{1,0:T(1,128)}', space=vmem, size = 0x9000, scoped, tag = 'internal scratch']
  %s0 = inlined_call_operand.hbm [shape: f32[1,2048], index: 0, kind: input, shape index: {}]
  %s1 = inlined_call_operand.hbm [shape: f32[1,2048], index: 1, kind: output, shape index: {}]
  %s2 = sld [smem:[#allocation0]]
  $region18: #{tpu_custom_call.1} parent=0
    _
  %s4 = ssub.s32 1, %s2
  %s5 = scalar_select 0, %s4, %s2
  $region1: #{tpu_custom_call.1} parent=0
    #allocation2 [shape = 'u8[8192]{0}', space=vmem, size = 0x2000, scoped, tag = 'input window, operand 0, single buffered']
    #allocation3 [shape = 's32[1]{0}', space=sflag, size = 0x4, scoped, tag = 'scoped memory for tpu_custom_call.1']
    #allocation4 [shape = 's32[1]{0}', space=sflag, size = 0x4, scoped, tag = 'scoped memory for tpu_custom_call.1']
    #allocation5 [shape = 'u8[8192]{0}', space=vmem, size = 0x2000, scoped, tag = 'output window, operand 0, single buffered']
    %6 = vsyncpa [#allocation3], 0
    %7 = vsyncpa [#allocation4], 0
    // Predicated region
    $region2: #{tpu_custom_call.1} parent=1 // pred_check
      _
    $region3: #{tpu_custom_call.1} parent=1 // pred_check_branch
      %9 = sbr.rel (0) target = $region5
    $region4: #{tpu_custom_call.1} parent=1 // pred_region
      %11 = vsyncadd [#allocation3], 0
      %s13 = sshll.u32 %s0, 4
      %s14 = int_to_ptr.hbm [resolvable:$true] %s13
      %s15 = sshll.u32 [#allocation2], 4
      %s16 = int_to_ptr.vmem [resolvable:$true] %s15
      %18 = dma.hbm_to_vmem [thread:$0]  %s14, 256, %s16, [#allocation3]
    $region5: #{tpu_custom_call.1} parent=1 // pred_fallthru
      _
    // Predicated region
    $region6: #{tpu_custom_call.1} parent=1 // pred_check
      _
    $region7: #{tpu_custom_call.1} parent=1 // pred_check_branch
      %20 = sbr.rel (0) target = $region9
    $region8: #{tpu_custom_call.1} parent=1 // pred_region
      %22 = dma.done [#allocation3], 256
    $region9: #{tpu_custom_call.1} parent=1 // pred_fallthru
      _
    %v23 = vld [vmem:[#allocation2] sm:$0xff]
    %v24 = vld [vmem:[#allocation2 + $0x8] sm:$0xff]
    %v25 = vtanh.pop %v23
    %v26 = vtanh.pop %v24
    %v27 = vmul.f32 %v25, 0.6931472
    %v28 = vmul.f32 %v26, 0.6931472
    %v29 = vmul.f32 %v27, 1.442695
    %v30 = vpow.pop %v29
    %v31 = vmul.f32 %v28, 1.442695
    %v32 = vpow.pop %v31
    %33 = vst [vmem:[#allocation5] sm:$0xff] %v30
    %34 = vst [vmem:[#allocation5 + $0x8] sm:$0xff] %v32
    // Predicated region
    $region10: #{tpu_custom_call.1} parent=1 // pred_check
      _
    $region11: #{tpu_custom_call.1} parent=1 // pred_check_branch
      %36 = sbr.rel (0) target = $region13
    $region12: #{tpu_custom_call.1} parent=1 // pred_region
      %38 = vsyncadd [#allocation4], 0
      %s40 = sshll.u32 [#allocation5], 4
      %s41 = int_to_ptr.vmem [resolvable:$true] %s40
      %s42 = sshll.u32 %s1, 4
      %s43 = int_to_ptr.hbm [resolvable:$true] %s42
      %45 = dma.vmem_to_hbm [thread:$0]  %s41, 256, %s43, [#allocation4]
    $region13: #{tpu_custom_call.1} parent=1 // pred_fallthru
      _
    // Predicated region
    $region14: #{tpu_custom_call.1} parent=1 // pred_check
      _
    $region15: #{tpu_custom_call.1} parent=1 // pred_check_branch
      %47 = sbr.rel (0) target = $region17
    $region16: #{tpu_custom_call.1} parent=1 // pred_region
      %49 = dma.done [#allocation4], 256
    $region17: #{tpu_custom_call.1} parent=1 // pred_fallthru
      _
    %50 = vsyncpa [#allocation3], 1
    %51 = vsyncpa [#allocation4], 1

</llo_original>
